<compile_context>
chip_gen: v7x
topology: tpu7x:2x2x1
jax: 0.10.0
libtpu: 0.0.40
codegen_flags: <defaults>
</compile_context>

<pallas_src>
import functools

import jax
import jax.numpy as jnp
from jax.experimental import pallas as pl
from jax.experimental.pallas import tpu as pltpu


NEG_SLOPE = 0.01          # F.leaky_relu default negative_slope
LANE = 128                # lane (minor) dimension of every block
_TARGET_BLOCK_BYTES = 2 << 20   # ~2 MiB per input block (fits v7x 32MiB scoped VMEM
                                # with in+out double-buffering + intermediates)


def _self_attention_kernel(x_ref, w1_ref, w2_ref, w3_ref, o_ref):
    """x_ref/o_ref: (C, TS, LANE) VMEM blocks.  w*_ref: small f32 SMEM arrays."""
    C = x_ref.shape[0]
    c1 = C // 2
    c2 = C // 4

    # Per-channel (TS, LANE) tiles -- fully packed (8,128) vregs.
    xc = [x_ref[c].astype(jnp.float32) for c in range(C)]

    def lrelu(v):
        return jnp.where(v > 0.0, v, NEG_SLOPE * v)

    # ---- first 1x1 conv (C -> C//2) + leaky_relu: scalar-weight VPU MACs ----
    y1 = []
    for o in range(c1):
        acc = w1_ref[0, o] * xc[0]
        for c in range(1, C):
            acc = acc + w1_ref[c, o] * xc[c]
        y1.append(lrelu(acc))

    # ---- second 1x1 conv (C//2 -> C//4) + leaky_relu ----
    y2 = []
    for o in range(c2):
        acc = w2_ref[0, o] * y1[0]
        for i in range(1, c1):
            acc = acc + w2_ref[i, o] * y1[i]
        y2.append(lrelu(acc))

    # ---- third 1x1 conv (C//4 -> 1) + sigmoid -> spatial attention map ----
    att = w3_ref[0, 0] * y2[0]
    for i in range(1, c2):
        att = att + w3_ref[i, 0] * y2[i]
    att = jax.nn.sigmoid(att)                       # (TS, LANE)

    # ---- gate the input, channel by channel (pure elementwise) ----
    for c in range(C):
        o_ref[c] = (xc[c] * att).astype(o_ref.dtype)


def _choose_ts(n_s, c, itemsize):
    """Rows-of-128 per block: ~2 MiB blocks, multiple of 8 (or full extent)."""
    ts = max(1, _TARGET_BLOCK_BYTES // (c * LANE * itemsize))
    if ts >= n_s:
        return n_s                      # full extent is always a legal block dim
    return max(8, (ts // 8) * 8)        # (8,128) tiling rule for 2nd-minor dim


@jax.jit
def self_attention_pallas(x_nchw, w1, w2, w3):
    """x_nchw: [B, C, H, W]; w1: [C, C//2]; w2: [C//2, C//4]; w3: [C//4, 1]."""
    B, C, H, W = x_nchw.shape
    assert C >= 4 and C % 4 == 0, "in_ch must be a multiple of 4"
    HW = H * W

    # NCHW is contiguous in (H*W); these reshapes are metadata-only (no copy).
    x3 = x_nchw.reshape(B, C, HW)
    pad = (-HW) % LANE
    if pad:
        # Rare fallback for H*W not a multiple of 128: one small pad pass.
        x3 = jnp.pad(x3, ((0, 0), (0, 0), (0, pad)))
    HWp = HW + pad
    n_s = HWp // LANE
    x4 = x3.reshape(B, C, n_s, LANE)

    itemsize = jnp.dtype(x_nchw.dtype).itemsize
    TS = _choose_ts(n_s, C, itemsize)
    grid = (B, pl.cdiv(n_s, TS))

    # Tiny weights -> f32 scalars in SMEM.
    w1f = w1.astype(jnp.float32)
    w2f = w2.astype(jnp.float32)
    w3f = w3.astype(jnp.float32)

    n_pts = B * HW
    macs_per_pt = C * (C // 2) + (C // 2) * (C // 4) + (C // 4) + C
    cost = pl.CostEstimate(
        flops=2 * n_pts * macs_per_pt,
        transcendentals=n_pts,
        bytes_accessed=2 * x_nchw.size * itemsize
        + (w1.size + w2.size + w3.size) * 4,
    )

    blk = (None, C, TS, LANE)           # batch dim squeezed out of the kernel
    idx = lambda b, j: (b, 0, j, 0)

    out4 = pl.pallas_call(
        _self_attention_kernel,
        out_shape=jax.ShapeDtypeStruct((B, C, n_s, LANE), x_nchw.dtype),
        grid=grid,
        in_specs=[
            pl.BlockSpec(blk, idx),
            pl.BlockSpec(memory_space=pltpu.MemorySpace.SMEM),
            pl.BlockSpec(memory_space=pltpu.MemorySpace.SMEM),
            pl.BlockSpec(memory_space=pltpu.MemorySpace.SMEM),
        ],
        out_specs=pl.BlockSpec(blk, idx),
        compiler_params=pltpu.CompilerParams(
            dimension_semantics=("parallel", "parallel"),
        ),
        cost_estimate=cost,
    )(x4, w1f, w2f, w3f)

    out3 = out4.reshape(B, C, HWp)
    if pad:
        out3 = out3[:, :, :HW]
    return out3.reshape(B, C, H, W)


def self_attention_ref(x_nchw, w1, w2, w3):
    """Pure-JAX reference mirroring the PyTorch forward."""
    x = jnp.transpose(x_nchw, (0, 2, 3, 1)).astype(jnp.float32)  # [B,H,W,C]
    y = x @ w1.astype(jnp.float32)
    y = jnp.where(y > 0, y, NEG_SLOPE * y)
    y = y @ w2.astype(jnp.float32)
    y = jnp.where(y > 0, y, NEG_SLOPE * y)
    att = jax.nn.sigmoid(y @ w3.astype(jnp.float32))             # [B,H,W,1]
    out = x * att
    return jnp.transpose(out, (0, 3, 1, 2)).astype(x_nchw.dtype)


if __name__ == "__main__":
    # Small shapes consistent with the module (dim=2, NCHW input).
    B, C, H, W = 2, 8, 16, 16  # in_ch = 8 -> hidden 4 -> hidden 2 -> 1

    key = jax.random.PRNGKey(0)
    kx, k1, k2, k3 = jax.random.split(key, 4)

    x = jax.random.normal(kx, (B, C, H, W), dtype=jnp.float32)

    # PyTorch Conv2d weights are [out, in, 1, 1]; kept here as [in, out] mats.
    w1 = jax.random.normal(k1, (C, C // 2), dtype=jnp.float32) * 0.3
    w2 = jax.random.normal(k2, (C // 2, C // 4), dtype=jnp.float32) * 0.3
    w3 = jax.random.normal(k3, (C // 4, 1), dtype=jnp.float32) * 0.3

    out = self_attention_pallas(x, w1, w2, w3)
    out = jax.block_until_ready(out)

    ref = self_attention_ref(x, w1, w2, w3)
    assert out.shape == (B, C, H, W)
    assert jnp.allclose(out, ref, atol=1e-5, rtol=1e-5), "mismatch vs reference"

    print("KERNEL_OK")
</pallas_src>

<mosaic_0001>
module attributes {stable_mosaic.version = 11 : i64} {
  func.func @_self_attention_kernel(%arg0: i32, %arg1: i32, %arg2: memref<1x8x2x128xf32, #tpu.memory_space<vmem>>, %arg3: memref<8x4xf32, #tpu.memory_space<smem>>, %arg4: memref<4x2xf32, #tpu.memory_space<smem>>, %arg5: memref<2x1xf32, #tpu.memory_space<smem>>, %arg6: memref<1x8x2x128xf32, #tpu.memory_space<vmem>>) attributes {dimension_semantics = [#tpu.dimension_semantics<parallel>, #tpu.dimension_semantics<parallel>], iteration_bounds = array<i64: 2, 1>, scalar_prefetch = 0 : i64, scratch_operands = 0 : i64, tpu.core_type = #tpu.core_type<tc>, window_params = [{transform_indices = @transform_0, window_bounds = array<i64: 1, 8, 2, 128>}, {transform_indices = @transform_1, window_bounds = array<i64: 8, 4>}, {transform_indices = @transform_2, window_bounds = array<i64: 4, 2>}, {transform_indices = @transform_3, window_bounds = array<i64: 2, 1>}, {transform_indices = @transform_4, window_bounds = array<i64: 1, 8, 2, 128>}]} {
    %c0 = arith.constant 0 : index
    %c0_0 = arith.constant 0 : index
    %c0_1 = arith.constant 0 : index
    %c0_2 = arith.constant 0 : index
    %0 = vector.load %arg2[%c0, %c0_0, %c0_1, %c0_2] : memref<1x8x2x128xf32, #tpu.memory_space<vmem>>, vector<1x1x2x128xf32>
    %1 = vector.shape_cast %0 : vector<1x1x2x128xf32> to vector<2x128xf32>
    %c0_3 = arith.constant 0 : index
    %c1 = arith.constant 1 : index
    %c0_4 = arith.constant 0 : index
    %c0_5 = arith.constant 0 : index
    %2 = vector.load %arg2[%c0_3, %c1, %c0_4, %c0_5] : memref<1x8x2x128xf32, #tpu.memory_space<vmem>>, vector<1x1x2x128xf32>
    %3 = vector.shape_cast %2 : vector<1x1x2x128xf32> to vector<2x128xf32>
    %c0_6 = arith.constant 0 : index
    %c2 = arith.constant 2 : index
    %c0_7 = arith.constant 0 : index
    %c0_8 = arith.constant 0 : index
    %4 = vector.load %arg2[%c0_6, %c2, %c0_7, %c0_8] : memref<1x8x2x128xf32, #tpu.memory_space<vmem>>, vector<1x1x2x128xf32>
    %5 = vector.shape_cast %4 : vector<1x1x2x128xf32> to vector<2x128xf32>
    %c0_9 = arith.constant 0 : index
    %c3 = arith.constant 3 : index
    %c0_10 = arith.constant 0 : index
    %c0_11 = arith.constant 0 : index
    %6 = vector.load %arg2[%c0_9, %c3, %c0_10, %c0_11] : memref<1x8x2x128xf32, #tpu.memory_space<vmem>>, vector<1x1x2x128xf32>
    %7 = vector.shape_cast %6 : vector<1x1x2x128xf32> to vector<2x128xf32>
    %c0_12 = arith.constant 0 : index
    %c4 = arith.constant 4 : index
    %c0_13 = arith.constant 0 : index
    %c0_14 = arith.constant 0 : index
    %8 = vector.load %arg2[%c0_12, %c4, %c0_13, %c0_14] : memref<1x8x2x128xf32, #tpu.memory_space<vmem>>, vector<1x1x2x128xf32>
    %9 = vector.shape_cast %8 : vector<1x1x2x128xf32> to vector<2x128xf32>
    %c0_15 = arith.constant 0 : index
    %c5 = arith.constant 5 : index
    %c0_16 = arith.constant 0 : index
    %c0_17 = arith.constant 0 : index
    %10 = vector.load %arg2[%c0_15, %c5, %c0_16, %c0_17] : memref<1x8x2x128xf32, #tpu.memory_space<vmem>>, vector<1x1x2x128xf32>
    %11 = vector.shape_cast %10 : vector<1x1x2x128xf32> to vector<2x128xf32>
    %c0_18 = arith.constant 0 : index
    %c6 = arith.constant 6 : index
    %c0_19 = arith.constant 0 : index
    %c0_20 = arith.constant 0 : index
    %12 = vector.load %arg2[%c0_18, %c6, %c0_19, %c0_20] : memref<1x8x2x128xf32, #tpu.memory_space<vmem>>, vector<1x1x2x128xf32>
    %13 = vector.shape_cast %12 : vector<1x1x2x128xf32> to vector<2x128xf32>
    %c0_21 = arith.constant 0 : index
    %c7 = arith.constant 7 : index
    %c0_22 = arith.constant 0 : index
    %c0_23 = arith.constant 0 : index
    %14 = vector.load %arg2[%c0_21, %c7, %c0_22, %c0_23] : memref<1x8x2x128xf32, #tpu.memory_space<vmem>>, vector<1x1x2x128xf32>
    %15 = vector.shape_cast %14 : vector<1x1x2x128xf32> to vector<2x128xf32>
    %c0_24 = arith.constant 0 : index
    %c0_25 = arith.constant 0 : index
    %16 = memref.load %arg3[%c0_24, %c0_25] : memref<8x4xf32, #tpu.memory_space<smem>>
    %17 = vector.broadcast %16 : f32 to vector<2x128xf32>
    %18 = arith.mulf %17, %1 : vector<2x128xf32>
    %c1_26 = arith.constant 1 : index
    %c0_27 = arith.constant 0 : index
    %19 = memref.load %arg3[%c1_26, %c0_27] : memref<8x4xf32, #tpu.memory_space<smem>>
    %20 = vector.broadcast %19 : f32 to vector<2x128xf32>
    %21 = arith.mulf %20, %3 : vector<2x128xf32>
    %22 = arith.addf %18, %21 : vector<2x128xf32>
    %c2_28 = arith.constant 2 : index
    %c0_29 = arith.constant 0 : index
    %23 = memref.load %arg3[%c2_28, %c0_29] : memref<8x4xf32, #tpu.memory_space<smem>>
    %24 = vector.broadcast %23 : f32 to vector<2x128xf32>
    %25 = arith.mulf %24, %5 : vector<2x128xf32>
    %26 = arith.addf %22, %25 : vector<2x128xf32>
    %c3_30 = arith.constant 3 : index
    %c0_31 = arith.constant 0 : index
    %27 = memref.load %arg3[%c3_30, %c0_31] : memref<8x4xf32, #tpu.memory_space<smem>>
    %28 = vector.broadcast %27 : f32 to vector<2x128xf32>
    %29 = arith.mulf %28, %7 : vector<2x128xf32>
    %30 = arith.addf %26, %29 : vector<2x128xf32>
    %c4_32 = arith.constant 4 : index
    %c0_33 = arith.constant 0 : index
    %31 = memref.load %arg3[%c4_32, %c0_33] : memref<8x4xf32, #tpu.memory_space<smem>>
    %32 = vector.broadcast %31 : f32 to vector<2x128xf32>
    %33 = arith.mulf %32, %9 : vector<2x128xf32>
    %34 = arith.addf %30, %33 : vector<2x128xf32>
    %c5_34 = arith.constant 5 : index
    %c0_35 = arith.constant 0 : index
    %35 = memref.load %arg3[%c5_34, %c0_35] : memref<8x4xf32, #tpu.memory_space<smem>>
    %36 = vector.broadcast %35 : f32 to vector<2x128xf32>
    %37 = arith.mulf %36, %11 : vector<2x128xf32>
    %38 = arith.addf %34, %37 : vector<2x128xf32>
    %c6_36 = arith.constant 6 : index
    %c0_37 = arith.constant 0 : index
    %39 = memref.load %arg3[%c6_36, %c0_37] : memref<8x4xf32, #tpu.memory_space<smem>>
    %40 = vector.broadcast %39 : f32 to vector<2x128xf32>
    %41 = arith.mulf %40, %13 : vector<2x128xf32>
    %42 = arith.addf %38, %41 : vector<2x128xf32>
    %c7_38 = arith.constant 7 : index
    %c0_39 = arith.constant 0 : index
    %43 = memref.load %arg3[%c7_38, %c0_39] : memref<8x4xf32, #tpu.memory_space<smem>>
    %44 = vector.broadcast %43 : f32 to vector<2x128xf32>
    %45 = arith.mulf %44, %15 : vector<2x128xf32>
    %46 = arith.addf %42, %45 : vector<2x128xf32>
    %cst = arith.constant 0.000000e+00 : f32
    %47 = vector.broadcast %cst : f32 to vector<2x128xf32>
    %48 = arith.cmpf ogt, %46, %47 : vector<2x128xf32>
    %cst_40 = arith.constant 0.00999999977 : f32
    %49 = vector.broadcast %cst_40 : f32 to vector<2x128xf32>
    %50 = arith.mulf %49, %46 : vector<2x128xf32>
    %51 = arith.select %48, %46, %50 : vector<2x128xi1>, vector<2x128xf32>
    %c0_41 = arith.constant 0 : index
    %c1_42 = arith.constant 1 : index
    %52 = memref.load %arg3[%c0_41, %c1_42] : memref<8x4xf32, #tpu.memory_space<smem>>
    %53 = vector.broadcast %52 : f32 to vector<2x128xf32>
    %54 = arith.mulf %53, %1 : vector<2x128xf32>
    %c1_43 = arith.constant 1 : index
    %c1_44 = arith.constant 1 : index
    %55 = memref.load %arg3[%c1_43, %c1_44] : memref<8x4xf32, #tpu.memory_space<smem>>
    %56 = vector.broadcast %55 : f32 to vector<2x128xf32>
    %57 = arith.mulf %56, %3 : vector<2x128xf32>
    %58 = arith.addf %54, %57 : vector<2x128xf32>
    %c2_45 = arith.constant 2 : index
    %c1_46 = arith.constant 1 : index
    %59 = memref.load %arg3[%c2_45, %c1_46] : memref<8x4xf32, #tpu.memory_space<smem>>
    %60 = vector.broadcast %59 : f32 to vector<2x128xf32>
    %61 = arith.mulf %60, %5 : vector<2x128xf32>
    %62 = arith.addf %58, %61 : vector<2x128xf32>
    %c3_47 = arith.constant 3 : index
    %c1_48 = arith.constant 1 : index
    %63 = memref.load %arg3[%c3_47, %c1_48] : memref<8x4xf32, #tpu.memory_space<smem>>
    %64 = vector.broadcast %63 : f32 to vector<2x128xf32>
    %65 = arith.mulf %64, %7 : vector<2x128xf32>
    %66 = arith.addf %62, %65 : vector<2x128xf32>
    %c4_49 = arith.constant 4 : index
    %c1_50 = arith.constant 1 : index
    %67 = memref.load %arg3[%c4_49, %c1_50] : memref<8x4xf32, #tpu.memory_space<smem>>
    %68 = vector.broadcast %67 : f32 to vector<2x128xf32>
    %69 = arith.mulf %68, %9 : vector<2x128xf32>
    %70 = arith.addf %66, %69 : vector<2x128xf32>
    %c5_51 = arith.constant 5 : index
    %c1_52 = arith.constant 1 : index
    %71 = memref.load %arg3[%c5_51, %c1_52] : memref<8x4xf32, #tpu.memory_space<smem>>
    %72 = vector.broadcast %71 : f32 to vector<2x128xf32>
    %73 = arith.mulf %72, %11 : vector<2x128xf32>
    %74 = arith.addf %70, %73 : vector<2x128xf32>
    %c6_53 = arith.constant 6 : index
    %c1_54 = arith.constant 1 : index
    %75 = memref.load %arg3[%c6_53, %c1_54] : memref<8x4xf32, #tpu.memory_space<smem>>
    %76 = vector.broadcast %75 : f32 to vector<2x128xf32>
    %77 = arith.mulf %76, %13 : vector<2x128xf32>
    %78 = arith.addf %74, %77 : vector<2x128xf32>
    %c7_55 = arith.constant 7 : index
    %c1_56 = arith.constant 1 : index
    %79 = memref.load %arg3[%c7_55, %c1_56] : memref<8x4xf32, #tpu.memory_space<smem>>
    %80 = vector.broadcast %79 : f32 to vector<2x128xf32>
    %81 = arith.mulf %80, %15 : vector<2x128xf32>
    %82 = arith.addf %78, %81 : vector<2x128xf32>
    %cst_57 = arith.constant 0.000000e+00 : f32
    %83 = vector.broadcast %cst_57 : f32 to vector<2x128xf32>
    %84 = arith.cmpf ogt, %82, %83 : vector<2x128xf32>
    %cst_58 = arith.constant 0.00999999977 : f32
    %85 = vector.broadcast %cst_58 : f32 to vector<2x128xf32>
    %86 = arith.mulf %85, %82 : vector<2x128xf32>
    %87 = arith.select %84, %82, %86 : vector<2x128xi1>, vector<2x128xf32>
    %c0_59 = arith.constant 0 : index
    %c2_60 = arith.constant 2 : index
    %88 = memref.load %arg3[%c0_59, %c2_60] : memref<8x4xf32, #tpu.memory_space<smem>>
    %89 = vector.broadcast %88 : f32 to vector<2x128xf32>
    %90 = arith.mulf %89, %1 : vector<2x128xf32>
    %c1_61 = arith.constant 1 : index
    %c2_62 = arith.constant 2 : index
    %91 = memref.load %arg3[%c1_61, %c2_62] : memref<8x4xf32, #tpu.memory_space<smem>>
    %92 = vector.broadcast %91 : f32 to vector<2x128xf32>
    %93 = arith.mulf %92, %3 : vector<2x128xf32>
    %94 = arith.addf %90, %93 : vector<2x128xf32>
    %c2_63 = arith.constant 2 : index
    %c2_64 = arith.constant 2 : index
    %95 = memref.load %arg3[%c2_63, %c2_64] : memref<8x4xf32, #tpu.memory_space<smem>>
    %96 = vector.broadcast %95 : f32 to vector<2x128xf32>
    %97 = arith.mulf %96, %5 : vector<2x128xf32>
    %98 = arith.addf %94, %97 : vector<2x128xf32>
    %c3_65 = arith.constant 3 : index
    %c2_66 = arith.constant 2 : index
    %99 = memref.load %arg3[%c3_65, %c2_66] : memref<8x4xf32, #tpu.memory_space<smem>>
    %100 = vector.broadcast %99 : f32 to vector<2x128xf32>
    %101 = arith.mulf %100, %7 : vector<2x128xf32>
    %102 = arith.addf %98, %101 : vector<2x128xf32>
    %c4_67 = arith.constant 4 : index
    %c2_68 = arith.constant 2 : index
    %103 = memref.load %arg3[%c4_67, %c2_68] : memref<8x4xf32, #tpu.memory_space<smem>>
    %104 = vector.broadcast %103 : f32 to vector<2x128xf32>
    %105 = arith.mulf %104, %9 : vector<2x128xf32>
    %106 = arith.addf %102, %105 : vector<2x128xf32>
    %c5_69 = arith.constant 5 : index
    %c2_70 = arith.constant 2 : index
    %107 = memref.load %arg3[%c5_69, %c2_70] : memref<8x4xf32, #tpu.memory_space<smem>>
    %108 = vector.broadcast %107 : f32 to vector<2x128xf32>
    %109 = arith.mulf %108, %11 : vector<2x128xf32>
    %110 = arith.addf %106, %109 : vector<2x128xf32>
    %c6_71 = arith.constant 6 : index
    %c2_72 = arith.constant 2 : index
    %111 = memref.load %arg3[%c6_71, %c2_72] : memref<8x4xf32, #tpu.memory_space<smem>>
    %112 = vector.broadcast %111 : f32 to vector<2x128xf32>
    %113 = arith.mulf %112, %13 : vector<2x128xf32>
    %114 = arith.addf %110, %113 : vector<2x128xf32>
    %c7_73 = arith.constant 7 : index
    %c2_74 = arith.constant 2 : index
    %115 = memref.load %arg3[%c7_73, %c2_74] : memref<8x4xf32, #tpu.memory_space<smem>>
    %116 = vector.broadcast %115 : f32 to vector<2x128xf32>
    %117 = arith.mulf %116, %15 : vector<2x128xf32>
    %118 = arith.addf %114, %117 : vector<2x128xf32>
    %cst_75 = arith.constant 0.000000e+00 : f32
    %119 = vector.broadcast %cst_75 : f32 to vector<2x128xf32>
    %120 = arith.cmpf ogt, %118, %119 : vector<2x128xf32>
    %cst_76 = arith.constant 0.00999999977 : f32
    %121 = vector.broadcast %cst_76 : f32 to vector<2x128xf32>
    %122 = arith.mulf %121, %118 : vector<2x128xf32>
    %123 = arith.select %120, %118, %122 : vector<2x128xi1>, vector<2x128xf32>
    %c0_77 = arith.constant 0 : index
    %c3_78 = arith.constant 3 : index
    %124 = memref.load %arg3[%c0_77, %c3_78] : memref<8x4xf32, #tpu.memory_space<smem>>
    %125 = vector.broadcast %124 : f32 to vector<2x128xf32>
    %126 = arith.mulf %125, %1 : vector<2x128xf32>
    %c1_79 = arith.constant 1 : index
    %c3_80 = arith.constant 3 : index
    %127 = memref.load %arg3[%c1_79, %c3_80] : memref<8x4xf32, #tpu.memory_space<smem>>
    %128 = vector.broadcast %127 : f32 to vector<2x128xf32>
    %129 = arith.mulf %128, %3 : vector<2x128xf32>
    %130 = arith.addf %126, %129 : vector<2x128xf32>
    %c2_81 = arith.constant 2 : index
    %c3_82 = arith.constant 3 : index
    %131 = memref.load %arg3[%c2_81, %c3_82] : memref<8x4xf32, #tpu.memory_space<smem>>
    %132 = vector.broadcast %131 : f32 to vector<2x128xf32>
    %133 = arith.mulf %132, %5 : vector<2x128xf32>
    %134 = arith.addf %130, %133 : vector<2x128xf32>
    %c3_83 = arith.constant 3 : index
    %c3_84 = arith.constant 3 : index
    %135 = memref.load %arg3[%c3_83, %c3_84] : memref<8x4xf32, #tpu.memory_space<smem>>
    %136 = vector.broadcast %135 : f32 to vector<2x128xf32>
    %137 = arith.mulf %136, %7 : vector<2x128xf32>
    %138 = arith.addf %134, %137 : vector<2x128xf32>
    %c4_85 = arith.constant 4 : index
    %c3_86 = arith.constant 3 : index
    %139 = memref.load %arg3[%c4_85, %c3_86] : memref<8x4xf32, #tpu.memory_space<smem>>
    %140 = vector.broadcast %139 : f32 to vector<2x128xf32>
    %141 = arith.mulf %140, %9 : vector<2x128xf32>
    %142 = arith.addf %138, %141 : vector<2x128xf32>
    %c5_87 = arith.constant 5 : index
    %c3_88 = arith.constant 3 : index
    %143 = memref.load %arg3[%c5_87, %c3_88] : memref<8x4xf32, #tpu.memory_space<smem>>
    %144 = vector.broadcast %143 : f32 to vector<2x128xf32>
    %145 = arith.mulf %144, %11 : vector<2x128xf32>
    %146 = arith.addf %142, %145 : vector<2x128xf32>
    %c6_89 = arith.constant 6 : index
    %c3_90 = arith.constant 3 : index
    %147 = memref.load %arg3[%c6_89, %c3_90] : memref<8x4xf32, #tpu.memory_space<smem>>
    %148 = vector.broadcast %147 : f32 to vector<2x128xf32>
    %149 = arith.mulf %148, %13 : vector<2x128xf32>
    %150 = arith.addf %146, %149 : vector<2x128xf32>
    %c7_91 = arith.constant 7 : index
    %c3_92 = arith.constant 3 : index
    %151 = memref.load %arg3[%c7_91, %c3_92] : memref<8x4xf32, #tpu.memory_space<smem>>
    %152 = vector.broadcast %151 : f32 to vector<2x128xf32>
    %153 = arith.mulf %152, %15 : vector<2x128xf32>
    %154 = arith.addf %150, %153 : vector<2x128xf32>
    %cst_93 = arith.constant 0.000000e+00 : f32
    %155 = vector.broadcast %cst_93 : f32 to vector<2x128xf32>
    %156 = arith.cmpf ogt, %154, %155 : vector<2x128xf32>
    %cst_94 = arith.constant 0.00999999977 : f32
    %157 = vector.broadcast %cst_94 : f32 to vector<2x128xf32>
    %158 = arith.mulf %157, %154 : vector<2x128xf32>
    %159 = arith.select %156, %154, %158 : vector<2x128xi1>, vector<2x128xf32>
    %c0_95 = arith.constant 0 : index
    %c0_96 = arith.constant 0 : index
    %160 = memref.load %arg4[%c0_95, %c0_96] : memref<4x2xf32, #tpu.memory_space<smem>>
    %161 = vector.broadcast %160 : f32 to vector<2x128xf32>
    %162 = arith.mulf %161, %51 : vector<2x128xf32>
    %c1_97 = arith.constant 1 : index
    %c0_98 = arith.constant 0 : index
    %163 = memref.load %arg4[%c1_97, %c0_98] : memref<4x2xf32, #tpu.memory_space<smem>>
    %164 = vector.broadcast %163 : f32 to vector<2x128xf32>
    %165 = arith.mulf %164, %87 : vector<2x128xf32>
    %166 = arith.addf %162, %165 : vector<2x128xf32>
    %c2_99 = arith.constant 2 : index
    %c0_100 = arith.constant 0 : index
    %167 = memref.load %arg4[%c2_99, %c0_100] : memref<4x2xf32, #tpu.memory_space<smem>>
    %168 = vector.broadcast %167 : f32 to vector<2x128xf32>
    %169 = arith.mulf %168, %123 : vector<2x128xf32>
    %170 = arith.addf %166, %169 : vector<2x128xf32>
    %c3_101 = arith.constant 3 : index
    %c0_102 = arith.constant 0 : index
    %171 = memref.load %arg4[%c3_101, %c0_102] : memref<4x2xf32, #tpu.memory_space<smem>>
    %172 = vector.broadcast %171 : f32 to vector<2x128xf32>
    %173 = arith.mulf %172, %159 : vector<2x128xf32>
    %174 = arith.addf %170, %173 : vector<2x128xf32>
    %cst_103 = arith.constant 0.000000e+00 : f32
    %175 = vector.broadcast %cst_103 : f32 to vector<2x128xf32>
    %176 = arith.cmpf ogt, %174, %175 : vector<2x128xf32>
    %cst_104 = arith.constant 0.00999999977 : f32
    %177 = vector.broadcast %cst_104 : f32 to vector<2x128xf32>
    %178 = arith.mulf %177, %174 : vector<2x128xf32>
    %179 = arith.select %176, %174, %178 : vector<2x128xi1>, vector<2x128xf32>
    %c0_105 = arith.constant 0 : index
    %c1_106 = arith.constant 1 : index
    %180 = memref.load %arg4[%c0_105, %c1_106] : memref<4x2xf32, #tpu.memory_space<smem>>
    %181 = vector.broadcast %180 : f32 to vector<2x128xf32>
    %182 = arith.mulf %181, %51 : vector<2x128xf32>
    %c1_107 = arith.constant 1 : index
    %c1_108 = arith.constant 1 : index
    %183 = memref.load %arg4[%c1_107, %c1_108] : memref<4x2xf32, #tpu.memory_space<smem>>
    %184 = vector.broadcast %183 : f32 to vector<2x128xf32>
    %185 = arith.mulf %184, %87 : vector<2x128xf32>
    %186 = arith.addf %182, %185 : vector<2x128xf32>
    %c2_109 = arith.constant 2 : index
    %c1_110 = arith.constant 1 : index
    %187 = memref.load %arg4[%c2_109, %c1_110] : memref<4x2xf32, #tpu.memory_space<smem>>
    %188 = vector.broadcast %187 : f32 to vector<2x128xf32>
    %189 = arith.mulf %188, %123 : vector<2x128xf32>
    %190 = arith.addf %186, %189 : vector<2x128xf32>
    %c3_111 = arith.constant 3 : index
    %c1_112 = arith.constant 1 : index
    %191 = memref.load %arg4[%c3_111, %c1_112] : memref<4x2xf32, #tpu.memory_space<smem>>
    %192 = vector.broadcast %191 : f32 to vector<2x128xf32>
    %193 = arith.mulf %192, %159 : vector<2x128xf32>
    %194 = arith.addf %190, %193 : vector<2x128xf32>
    %cst_113 = arith.constant 0.000000e+00 : f32
    %195 = vector.broadcast %cst_113 : f32 to vector<2x128xf32>
    %196 = arith.cmpf ogt, %194, %195 : vector<2x128xf32>
    %cst_114 = arith.constant 0.00999999977 : f32
    %197 = vector.broadcast %cst_114 : f32 to vector<2x128xf32>
    %198 = arith.mulf %197, %194 : vector<2x128xf32>
    %199 = arith.select %196, %194, %198 : vector<2x128xi1>, vector<2x128xf32>
    %c0_115 = arith.constant 0 : index
    %c0_116 = arith.constant 0 : index
    %200 = memref.load %arg5[%c0_115, %c0_116] : memref<2x1xf32, #tpu.memory_space<smem>>
    %201 = vector.broadcast %200 : f32 to vector<2x128xf32>
    %202 = arith.mulf %201, %179 : vector<2x128xf32>
    %c1_117 = arith.constant 1 : index
    %c0_118 = arith.constant 0 : index
    %203 = memref.load %arg5[%c1_117, %c0_118] : memref<2x1xf32, #tpu.memory_space<smem>>
    %204 = vector.broadcast %203 : f32 to vector<2x128xf32>
    %205 = arith.mulf %204, %199 : vector<2x128xf32>
    %206 = arith.addf %202, %205 : vector<2x128xf32>
    %207 = arith.negf %206 : vector<2x128xf32>
    %208 = math.exp %207 : vector<2x128xf32>
    %cst_119 = arith.constant 1.000000e+00 : f32
    %209 = vector.broadcast %cst_119 : f32 to vector<2x128xf32>
    %210 = arith.addf %209, %208 : vector<2x128xf32>
    %211 = arith.divf %209, %210 : vector<2x128xf32>
    %212 = arith.mulf %1, %211 : vector<2x128xf32>
    %c0_120 = arith.constant 0 : index
    %c0_121 = arith.constant 0 : index
    %c0_122 = arith.constant 0 : index
    %c0_123 = arith.constant 0 : index
    %213 = vector.load %arg6[%c0_120, %c0_121, %c0_122, %c0_123] : memref<1x8x2x128xf32, #tpu.memory_space<vmem>>, vector<1x1x2x128xf32>
    %214 = vector.shape_cast %213 : vector<1x1x2x128xf32> to vector<2x128xf32>
    %215 = vector.shape_cast %212 : vector<2x128xf32> to vector<1x1x2x128xf32>
    tpu.vector_store %arg6[%c0_120, %c0_121, %c0_122, %c0_123], %215 {strides = array<i32>} : memref<1x8x2x128xf32, #tpu.memory_space<vmem>>, vector<1x1x2x128xf32>,
    %216 = arith.mulf %3, %211 : vector<2x128xf32>
    %c0_124 = arith.constant 0 : index
    %c1_125 = arith.constant 1 : index
    %c0_126 = arith.constant 0 : index
    %c0_127 = arith.constant 0 : index
    %217 = vector.load %arg6[%c0_124, %c1_125, %c0_126, %c0_127] : memref<1x8x2x128xf32, #tpu.memory_space<vmem>>, vector<1x1x2x128xf32>
    %218 = vector.shape_cast %217 : vector<1x1x2x128xf32> to vector<2x128xf32>
    %219 = vector.shape_cast %216 : vector<2x128xf32> to vector<1x1x2x128xf32>
    tpu.vector_store %arg6[%c0_124, %c1_125, %c0_126, %c0_127], %219 {strides = array<i32>} : memref<1x8x2x128xf32, #tpu.memory_space<vmem>>, vector<1x1x2x128xf32>,
    %220 = arith.mulf %5, %211 : vector<2x128xf32>
    %c0_128 = arith.constant 0 : index
    %c2_129 = arith.constant 2 : index
    %c0_130 = arith.constant 0 : index
    %c0_131 = arith.constant 0 : index
    %221 = vector.load %arg6[%c0_128, %c2_129, %c0_130, %c0_131] : memref<1x8x2x128xf32, #tpu.memory_space<vmem>>, vector<1x1x2x128xf32>
    %222 = vector.shape_cast %221 : vector<1x1x2x128xf32> to vector<2x128xf32>
    %223 = vector.shape_cast %220 : vector<2x128xf32> to vector<1x1x2x128xf32>
    tpu.vector_store %arg6[%c0_128, %c2_129, %c0_130, %c0_131], %223 {strides = array<i32>} : memref<1x8x2x128xf32, #tpu.memory_space<vmem>>, vector<1x1x2x128xf32>,
    %224 = arith.mulf %7, %211 : vector<2x128xf32>
    %c0_132 = arith.constant 0 : index
    %c3_133 = arith.constant 3 : index
    %c0_134 = arith.constant 0 : index
    %c0_135 = arith.constant 0 : index
    %225 = vector.load %arg6[%c0_132, %c3_133, %c0_134, %c0_135] : memref<1x8x2x128xf32, #tpu.memory_space<vmem>>, vector<1x1x2x128xf32>
    %226 = vector.shape_cast %225 : vector<1x1x2x128xf32> to vector<2x128xf32>
    %227 = vector.shape_cast %224 : vector<2x128xf32> to vector<1x1x2x128xf32>
    tpu.vector_store %arg6[%c0_132, %c3_133, %c0_134, %c0_135], %227 {strides = array<i32>} : memref<1x8x2x128xf32, #tpu.memory_space<vmem>>, vector<1x1x2x128xf32>,
    %228 = arith.mulf %9, %211 : vector<2x128xf32>
    %c0_136 = arith.constant 0 : index
    %c4_137 = arith.constant 4 : index
    %c0_138 = arith.constant 0 : index
    %c0_139 = arith.constant 0 : index
    %229 = vector.load %arg6[%c0_136, %c4_137, %c0_138, %c0_139] : memref<1x8x2x128xf32, #tpu.memory_space<vmem>>, vector<1x1x2x128xf32>
    %230 = vector.shape_cast %229 : vector<1x1x2x128xf32> to vector<2x128xf32>
    %231 = vector.shape_cast %228 : vector<2x128xf32> to vector<1x1x2x128xf32>
    tpu.vector_store %arg6[%c0_136, %c4_137, %c0_138, %c0_139], %231 {strides = array<i32>} : memref<1x8x2x128xf32, #tpu.memory_space<vmem>>, vector<1x1x2x128xf32>,
    %232 = arith.mulf %11, %211 : vector<2x128xf32>
    %c0_140 = arith.constant 0 : index
    %c5_141 = arith.constant 5 : index
    %c0_142 = arith.constant 0 : index
    %c0_143 = arith.constant 0 : index
    %233 = vector.load %arg6[%c0_140, %c5_141, %c0_142, %c0_143] : memref<1x8x2x128xf32, #tpu.memory_space<vmem>>, vector<1x1x2x128xf32>
    %234 = vector.shape_cast %233 : vector<1x1x2x128xf32> to vector<2x128xf32>
    %235 = vector.shape_cast %232 : vector<2x128xf32> to vector<1x1x2x128xf32>
    tpu.vector_store %arg6[%c0_140, %c5_141, %c0_142, %c0_143], %235 {strides = array<i32>} : memref<1x8x2x128xf32, #tpu.memory_space<vmem>>, vector<1x1x2x128xf32>,
    %236 = arith.mulf %13, %211 : vector<2x128xf32>
    %c0_144 = arith.constant 0 : index
    %c6_145 = arith.constant 6 : index
    %c0_146 = arith.constant 0 : index
    %c0_147 = arith.constant 0 : index
    %237 = vector.load %arg6[%c0_144, %c6_145, %c0_146, %c0_147] : memref<1x8x2x128xf32, #tpu.memory_space<vmem>>, vector<1x1x2x128xf32>
    %238 = vector.shape_cast %237 : vector<1x1x2x128xf32> to vector<2x128xf32>
    %239 = vector.shape_cast %236 : vector<2x128xf32> to vector<1x1x2x128xf32>
    tpu.vector_store %arg6[%c0_144, %c6_145, %c0_146, %c0_147], %239 {strides = array<i32>} : memref<1x8x2x128xf32, #tpu.memory_space<vmem>>, vector<1x1x2x128xf32>,
    %240 = arith.mulf %15, %211 : vector<2x128xf32>
    %c0_148 = arith.constant 0 : index
    %c7_149 = arith.constant 7 : index
    %c0_150 = arith.constant 0 : index
    %c0_151 = arith.constant 0 : index
    %241 = vector.load %arg6[%c0_148, %c7_149, %c0_150, %c0_151] : memref<1x8x2x128xf32, #tpu.memory_space<vmem>>, vector<1x1x2x128xf32>
    %242 = vector.shape_cast %241 : vector<1x1x2x128xf32> to vector<2x128xf32>
    %243 = vector.shape_cast %240 : vector<2x128xf32> to vector<1x1x2x128xf32>
    tpu.vector_store %arg6[%c0_148, %c7_149, %c0_150, %c0_151], %243 {strides = array<i32>} : memref<1x8x2x128xf32, #tpu.memory_space<vmem>>, vector<1x1x2x128xf32>,
    return
  }
  func.func @transform_0(%arg0: i32, %arg1: i32) -> (i32, i32, i32, i32) {
    %c0_i32 = arith.constant 0 : i32
    %c0_i32_0 = arith.constant 0 : i32
    %c0_i32_1 = arith.constant 0 : i32
    return %arg0, %c0_i32, %arg1, %c0_i32_0 : i32, i32, i32, i32
  }
  func.func @transform_1(%arg0: i32, %arg1: i32) -> (i32, i32) {
    %c0_i32 = arith.constant 0 : i32
    %c0_i32_0 = arith.constant 0 : i32
    %c0_i32_1 = arith.constant 0 : i32
    return %c0_i32, %c0_i32_0 : i32, i32
  }
  func.func @transform_2(%arg0: i32, %arg1: i32) -> (i32, i32) {
    %c0_i32 = arith.constant 0 : i32
    %c0_i32_0 = arith.constant 0 : i32
    %c0_i32_1 = arith.constant 0 : i32
    return %c0_i32, %c0_i32_0 : i32, i32
  }
  func.func @transform_3(%arg0: i32, %arg1: i32) -> (i32, i32) {
    %c0_i32 = arith.constant 0 : i32
    %c0_i32_0 = arith.constant 0 : i32
    %c0_i32_1 = arith.constant 0 : i32
    return %c0_i32, %c0_i32_0 : i32, i32
  }
  func.func @transform_4(%arg0: i32, %arg1: i32) -> (i32, i32, i32, i32) {
    %c0_i32 = arith.constant 0 : i32
    %c0_i32_0 = arith.constant 0 : i32
    %c0_i32_1 = arith.constant 0 : i32
    return %arg0, %c0_i32, %arg1, %c0_i32_0 : i32, i32, i32, i32
  }
}

</mosaic_0001>

<llo_original>
// kernel: self_attention_pallas.1
$region0: #{self_attention_pallas.1}
  #allocation0 [shape = 'u32[]', space=smem, size = 0x4, offset = 0x4, fixed_abs, tag = 'smem constant byte address 0x4 - core index']
  #allocation1 [shape = 'u32[144,128]{1,0:T(1,128)}', space=vmem, size = 0x12000, scoped, tag = 'internal scratch']
  %s0 = inlined_call_operand.vmem [shape: f32[2,8,2,128], index: 0, kind: input, shape index: {}]
  %s1 = inlined_call_operand.vmem [shape: f32[8,4], index: 1, kind: input, shape index: {}]
  %s2 = inlined_call_operand.vmem [shape: f32[4,2], index: 2, kind: input, shape index: {}]
  %s3 = inlined_call_operand.vmem [shape: f32[2,1], index: 3, kind: input, shape index: {}]
  %s4 = inlined_call_operand.vmem [shape: f32[2,8,2,128], index: 4, kind: output, shape index: {}]
  %s5 = sld [smem:[#allocation0]]
  $region61: #{self_attention_pallas.1} parent=0
    _
  %s7 = ssub.s32 1, %s5
  %s8 = scalar_select 0, %s7, %s5
  $region1: #{self_attention_pallas.1} parent=0
    #allocation2 [shape = 'u8[4096]{0}', space=smem, size = 0x1000, scoped, tag = 'input window, operand 1, single buffered']
    #allocation3 [shape = 's32[2]{0}', space=sflag, size = 0x8, scoped, tag = 'scoped memory for self_attention_pallas.1']
    #allocation4 [shape = 'u8[2048]{0}', space=smem, size = 0x800, scoped, tag = 'input window, operand 2, single buffered']
    #allocation5 [shape = 's32[1]{0}', space=sflag, size = 0x4, scoped, tag = 'scoped memory for self_attention_pallas.1']
    #allocation6 [shape = 'u8[1024]{0}', space=smem, size = 0x400, scoped, tag = 'input window, operand 3, single buffered']
    %9 = vsyncpa [#allocation3], 0
    %10 = vsyncpa [#allocation5], 0
    loop: start=0, step=1, limit=4
    $region2: #{self_attention_pallas.1} parent=1 // loop_pre_header
      _
    $region3: #{self_attention_pallas.1} parent=1 // loop_header
      %s12 = sphi 0, %s16
      %p13 = scmp.ge.s32.totalorder %s12, 4
      %s19 = sphi 0, %s31
      %s20 = sphi 0, %s27
      %s21 = sphi 0, %s19
      %s22 = sphi 0, %s20
      %s23 = sphi 0, %s21
      %s24 = sphi 0, %s22
      %s36 = sphi 0, %s38
      %s39 = sphi 0, %s36
      %s40 = sphi 0, %s39
      %s56 = sphi 0, %s40
      %s60 = sphi 0, %s60
      %s62 = sphi 0, %s60
      %s63 = sphi 0, %s62
      %s77 = sphi 0, %s63
      %s81 = sphi 0, %s81
      %s83 = sphi 0, %s81
      %s84 = sphi 0, %s83
      %s98 = sphi 0, %s84
      %s102 = sphi 0, %s102
      %s104 = sphi 0, %s102
      %s105 = sphi 0, %s104
      %s119 = sphi 0, %s105
      %s127 = sphi 0, %s129
      %s130 = sphi 0, %s127
      %s131 = sphi 0, %s130
      %s147 = sphi 0, %s131
    $region4: #{self_attention_pallas.1} parent=1 // loop_header_branch
      %15 = sbr.rel (%p13) target = $region8
    $region5: #{self_attention_pallas.1} parent=1 // loop_body
      %s17 = ssub.s32 %s12, 1
      %s18 = ssub.s32 %s12, 2
      %s25 = sadd.s32 1, %s20
      %p26 = scmp.ge.s32.totalorder %s25, 1
      %s27 = scalar_select %p26, 0, %s25
      %s28 = sadd.s32 1, %s19
      %s29 = scalar_select %p26, %s28, %s19
      %p30 = scmp.ge.s32.totalorder %s29, 2
      %s31 = scalar_select %p30, 0, %s29
      %s32 = ssub.s32 %s19, %s31
      %s33 = ssub.s32 %s20, %s27
      %s34 = sor.u32 %s32, %s33
      %p35 = scmp.eq.s32.totalorder %s34, 0
      %s37 = sadd.s32 %s36, 1
      %s38 = scalar_select %p35, %s36, %s37
      %p41 = pneg %p35
      %p42 = scmp.eq.s32.totalorder %s12, 1
      %p43 = por %p41, %p42
      %p44 = scmp.ne.s32.totalorder %s36, %s39
      %p45 = scmp.eq.s32.totalorder %s12, 0
      %p46 = por %p44, %p45
      %p47 = scmp.ne.s32.totalorder %s36, %s39
      %p48 = scmp.eq.s32.totalorder %s17, 1
      %p49 = por %p47, %p48
      %p50 = scmp.ne.s32.totalorder %s39, %s40
      %p51 = scmp.eq.s32.totalorder %s17, 0
      %p52 = por %p50, %p51
      %p53 = scmp.ne.s32.totalorder %s39, %s40
      %p54 = scmp.eq.s32.totalorder %s18, 1
      %p55 = por %p53, %p54
      %p57 = scmp.ne.s32.totalorder %s40, %s56
      %p58 = scmp.eq.s32.totalorder %s18, 0
      %p59 = por %p57, %p58
      %s61 = sadd.s32 %s60, 1
      %p64 = scmp.eq.s32.totalorder %s12, 1
      %p65 = scmp.ne.s32.totalorder %s60, %s62
      %p66 = scmp.eq.s32.totalorder %s12, 0
      %p67 = por %p65, %p66
      %p68 = scmp.ne.s32.totalorder %s60, %s62
      %p69 = scmp.eq.s32.totalorder %s17, 1
      %p70 = por %p68, %p69
      %p71 = scmp.ne.s32.totalorder %s62, %s63
      %p72 = scmp.eq.s32.totalorder %s17, 0
      %p73 = por %p71, %p72
      %p74 = scmp.ne.s32.totalorder %s62, %s63
      %p75 = scmp.eq.s32.totalorder %s18, 1
      %p76 = por %p74, %p75
      %p78 = scmp.ne.s32.totalorder %s63, %s77
      %p79 = scmp.eq.s32.totalorder %s18, 0
      %p80 = por %p78, %p79
      %s82 = sadd.s32 %s81, 1
      %p85 = scmp.eq.s32.totalorder %s12, 1
      %p86 = scmp.ne.s32.totalorder %s81, %s83
      %p87 = scmp.eq.s32.totalorder %s12, 0
      %p88 = por %p86, %p87
      %p89 = scmp.ne.s32.totalorder %s81, %s83
      %p90 = scmp.eq.s32.totalorder %s17, 1
      %p91 = por %p89, %p90
      %p92 = scmp.ne.s32.totalorder %s83, %s84
      %p93 = scmp.eq.s32.totalorder %s17, 0
      %p94 = por %p92, %p93
      %p95 = scmp.ne.s32.totalorder %s83, %s84
      %p96 = scmp.eq.s32.totalorder %s18, 1
      %p97 = por %p95, %p96
      %p99 = scmp.ne.s32.totalorder %s84, %s98
      %p100 = scmp.eq.s32.totalorder %s18, 0
      %p101 = por %p99, %p100
      %s103 = sadd.s32 %s102, 1
      %p106 = scmp.eq.s32.totalorder %s12, 1
      %p107 = scmp.ne.s32.totalorder %s102, %s104
      %p108 = scmp.eq.s32.totalorder %s12, 0
      %p109 = por %p107, %p108
      %p110 = scmp.ne.s32.totalorder %s102, %s104
      %p111 = scmp.eq.s32.totalorder %s17, 1
      %p112 = por %p110, %p111
      %p113 = scmp.ne.s32.totalorder %s104, %s105
      %p114 = scmp.eq.s32.totalorder %s17, 0
      %p115 = por %p113, %p114
      %p116 = scmp.ne.s32.totalorder %s104, %s105
      %p117 = scmp.eq.s32.totalorder %s18, 1
      %p118 = por %p116, %p117
      %p120 = scmp.ne.s32.totalorder %s105, %s119
      %p121 = scmp.eq.s32.totalorder %s18, 0
      %p122 = por %p120, %p121
      %s123 = ssub.s32 %s19, %s31
      %s124 = ssub.s32 %s20, %s27
      %s125 = sor.u32 %s123, %s124
      %p126 = scmp.eq.s32.totalorder %s125, 0
      %s128 = sadd.s32 %s127, 1
      %s129 = scalar_select %p126, %s127, %s128
      %p132 = pneg %p126
      %p133 = scmp.eq.s32.totalorder %s12, 1
      %p134 = por %p132, %p133
      %p135 = scmp.ne.s32.totalorder %s127, %s130
      %p136 = scmp.eq.s32.totalorder %s12, 0
      %p137 = por %p135, %p136
      %p138 = scmp.ne.s32.totalorder %s127, %s130
      %p139 = scmp.eq.s32.totalorder %s17, 1
      %p140 = por %p138, %p139
      %p141 = scmp.ne.s32.totalorder %s130, %s131
      %p142 = scmp.eq.s32.totalorder %s17, 0
      %p143 = por %p141, %p142
      %p144 = scmp.ne.s32.totalorder %s130, %s131
      %p145 = scmp.eq.s32.totalorder %s18, 1
      %p146 = por %p144, %p145
      %p148 = scmp.ne.s32.totalorder %s131, %s147
      %p149 = scmp.eq.s32.totalorder %s18, 0
      %p150 = por %p148, %p149
      %p151 = scmp.le.s32.totalorder 1, %s12
      %p152 = scmp.lt.s32.totalorder %s12, 3
      %p153 = pnand %p151, %p152
      %p154 = pneg %p153
      // Predicated region
      $region9: #{self_attention_pallas.1} parent=5 // pred_check
        _
      $region10: #{self_attention_pallas.1} parent=5 // pred_check_branch
        %156 = sbr.rel (%p153) target = $region12
      $region11: #{self_attention_pallas.1} parent=5 // pred_region
        %s157 = ssub.s32 %s12, 1
        // Predicated region
        $region13: #{self_attention_pallas.1} parent=11 // pred_check
          %p158 = pneg %p73
        $region14: #{self_attention_pallas.1} parent=11 // pred_check_branch
          %160 = sbr.rel (%p158) target = $region16
        $region15: #{self_attention_pallas.1} parent=11 // pred_region
          %s162 = ssub.s32 128, 128
          %163 = vsyncadd [#allocation3], %s162
          %s165 = sshll.u32 %s1, 4
          %s166 = int_to_ptr.vmem [resolvable:$true] %s165
          %168 = dma.vmem_to_smem %s166, 128, [#allocation2], [#allocation3]
        $region16: #{self_attention_pallas.1} parent=11 // pred_fallthru
          _
        // Predicated region
        $region17: #{self_attention_pallas.1} parent=11 // pred_check
          %p169 = pneg %p94
        $region18: #{self_attention_pallas.1} parent=11 // pred_check_branch
          %171 = sbr.rel (%p169) target = $region20
        $region19: #{self_attention_pallas.1} parent=11 // pred_region
          %s173 = ssub.s32 64, 64
          %174 = vsyncadd [#allocation5], %s173
          %s176 = sshll.u32 %s2, 4
          %s177 = int_to_ptr.vmem [resolvable:$true] %s176
          %179 = dma.vmem_to_smem %s177, 64, [#allocation4], [#allocation5]
        $region20: #{self_attention_pallas.1} parent=11 // pred_fallthru
          _
        // Predicated region
        $region21: #{self_attention_pallas.1} parent=11 // pred_check
          %p180 = pneg %p115
        $region22: #{self_attention_pallas.1} parent=11 // pred_check_branch
          %182 = sbr.rel (%p180) target = $region24
        $region23: #{self_attention_pallas.1} parent=11 // pred_region
          %s184 = ssub.s32 32, 32
          %185 = vsyncadd [#allocation5], %s184
          %s187 = sshll.u32 %s3, 4
          %s188 = int_to_ptr.vmem [resolvable:$true] %s187
          %190 = dma.vmem_to_smem %s188, 32, [#allocation6], [#allocation5]
        $region24: #{self_attention_pallas.1} parent=11 // pred_fallthru
          _
      $region12: #{self_attention_pallas.1} parent=5 // pred_fallthru
        _
      %p191 = scmp.lt.s32.totalorder %s12, 2
      // Predicated region
      $region25: #{self_attention_pallas.1} parent=5 // pred_check
        %p192 = pneg %p191
      $region26: #{self_attention_pallas.1} parent=5 // pred_check_branch
        %194 = sbr.rel (%p192) target = $region28
      $region27: #{self_attention_pallas.1} parent=5 // pred_region
        // Predicated region
        $region29: #{self_attention_pallas.1} parent=27 // pred_check
          %p195 = pneg %p46
        $region30: #{self_attention_pallas.1} parent=27 // pred_check_branch
          %197 = sbr.rel (%p195) target = $region32
        $region31: #{self_attention_pallas.1} parent=27 // pred_region
          %p198 = scmp.lt.s32.totalorder %s19, 1
          %s199 = scalar_select %p198, %s19, 1
          %p200 = scmp.lt.s32.totalorder %s20, 0
          %s201 = scalar_select %p200, %s20, 0
          %s202 = smul.addr %s199, 8
          %s203 = sadd.s32 %s201, %s202
          %s204 = smul.addr %s203, 2
          %s205 = scalar_lea.vmem %s0, %s204
        $region32: #{self_attention_pallas.1} parent=27 // pred_fallthru
          _
      $region28: #{self_attention_pallas.1} parent=5 // pred_fallthru
        _
      %p206 = scmp.le.s32.totalorder 1, %s12
      %p207 = scmp.lt.s32.totalorder %s12, 3
      %p208 = pnand %p206, %p207
      %p209 = pneg %p208
      // Predicated region
      $region33: #{self_attention_pallas.1} parent=5 // pred_check
        _
      $region34: #{self_attention_pallas.1} parent=5 // pred_check_branch
        %211 = sbr.rel (%p208) target = $region36
      $region35: #{self_attention_pallas.1} parent=5 // pred_region
        %s212 = ssub.s32 %s12, 1
        // Predicated region
        $region37: #{self_attention_pallas.1} parent=35 // pred_check
          %p213 = pneg %p73
        $region38: #{self_attention_pallas.1} parent=35 // pred_check_branch
          %215 = sbr.rel (%p213) target = $region40
        $region39: #{self_attention_pallas.1} parent=35 // pred_region
          %216 = dma.done [#allocation3], 128
        $region40: #{self_attention_pallas.1} parent=35 // pred_fallthru
          _
        // Predicated region
        $region41: #{self_attention_pallas.1} parent=35 // pred_check
          %p217 = pneg %p94
        $region42: #{self_attention_pallas.1} parent=35 // pred_check_branch
          %219 = sbr.rel (%p217) target = $region44
        $region43: #{self_attention_pallas.1} parent=35 // pred_region
          %220 = dma.done [#allocation5], 64
        $region44: #{self_attention_pallas.1} parent=35 // pred_fallthru
          _
        // Predicated region
        $region45: #{self_attention_pallas.1} parent=35 // pred_check
          %p221 = pneg %p115
        $region46: #{self_attention_pallas.1} parent=35 // pred_check_branch
          %223 = sbr.rel (%p221) target = $region48
        $region47: #{self_attention_pallas.1} parent=35 // pred_region
          %224 = dma.done [#allocation5], 32
        $region48: #{self_attention_pallas.1} parent=35 // pred_fallthru
          _
        %225 = sfence
        %p226 = scmp.lt.s32.totalorder %s21, 1
        %s227 = scalar_select %p226, %s21, 1
        %p228 = scmp.lt.s32.totalorder %s22, 0
        %s229 = scalar_select %p228, %s22, 0
        %s230 = smul.addr %s227, 8
        %s231 = sadd.s32 %s229, %s230
        %s232 = smul.addr %s231, 2
        %s233 = scalar_lea.vmem %s0, %s232
        %p234 = pneg %p52
        %p235 = pneg %p49
        %p236 = pneg %p73
        %p237 = pneg %p70
        %p238 = pneg %p94
        %p239 = pneg %p91
        %p240 = pneg %p115
        %p241 = pneg %p112
        %p242 = pneg %p143
        %p243 = pneg %p140
        %p244 = scmp.lt.s32.totalorder %s21, 1
        %s245 = scalar_select %p244, %s21, 1
        %p246 = scmp.lt.s32.totalorder %s22, 0
        %s247 = scalar_select %p246, %s22, 0
        %s248 = smul.addr %s245, 8
        %s249 = sadd.s32 %s247, %s248
        %s250 = smul.addr %s249, 2
        %s251 = scalar_lea.vmem %s4, %s250
        %p252 = scmp.lt.s32.totalorder %s21, 1
        %s253 = scalar_select %p252, %s21, 1
        %p254 = scmp.lt.s32.totalorder %s22, 0
        %s255 = scalar_select %p254, %s22, 0
        %s256 = smul.addr %s253, 8
        %s257 = sadd.s32 %s255, %s256
        %s258 = smul.addr %s257, 2
        %s259 = scalar_lea.vmem %s0, %s258
        %p260 = scmp.lt.s32.totalorder %s21, 1
        %s261 = scalar_select %p260, %s21, 1
        %p262 = scmp.lt.s32.totalorder %s22, 0
        %s263 = scalar_select %p262, %s22, 0
        %s264 = smul.addr %s261, 8
        %s265 = sadd.s32 %s263, %s264
        %s266 = smul.addr %s265, 2
        %s267 = scalar_lea.vmem %s4, %s266
        %v268 = vld [vmem:[%s259] sm:$0x3]
        %s269 = scalar_lea.vmem %s259, 2
        %v270 = vld [vmem:[%s269] sm:$0x3]
        %s271 = scalar_lea.vmem %s259, 4
        %v272 = vld [vmem:[%s271] sm:$0x3]
        %s273 = scalar_lea.vmem %s259, 6
        %v274 = vld [vmem:[%s273] sm:$0x3]
        %s275 = scalar_lea.vmem %s259, 8
        %v276 = vld [vmem:[%s275] sm:$0x3]
        %s277 = scalar_lea.vmem %s259, 10
        %v278 = vld [vmem:[%s277] sm:$0x3]
        %s279 = scalar_lea.vmem %s259, 12
        %v280 = vld [vmem:[%s279] sm:$0x3]
        %s281 = scalar_lea.vmem %s259, 14
        %v282 = vld [vmem:[%s281] sm:$0x3]
        %s283 = sld [smem:[#allocation2]]
        %v284 = vstv %s283
        %v285 = vmul.f32 %v284, %v268
        %s286 = sld [smem:[#allocation2 + $0x80]]
        %v287 = vstv %s286
        %v288 = vmul.f32 %v287, %v270
        %v289 = vadd.f32 %v285, %v288
        %s290 = sld [smem:[#allocation2 + $0x100]]
        %v291 = vstv %s290
        %v292 = vmul.f32 %v291, %v272
        %v293 = vadd.f32 %v289, %v292
        %s294 = sld [smem:[#allocation2 + $0x180]]
        %v295 = vstv %s294
        %v296 = vmul.f32 %v295, %v274
        %v297 = vadd.f32 %v293, %v296
        %s298 = sld [smem:[#allocation2 + $0x200]]
        %v299 = vstv %s298
        %v300 = vmul.f32 %v299, %v276
        %v301 = vadd.f32 %v297, %v300
        %s302 = sld [smem:[#allocation2 + $0x280]]
        %v303 = vstv %s302
        %v304 = vmul.f32 %v303, %v278
        %v305 = vadd.f32 %v301, %v304
        %s306 = sld [smem:[#allocation2 + $0x300]]
        %v307 = vstv %s306
        %v308 = vmul.f32 %v307, %v280
        %v309 = vadd.f32 %v305, %v308
        %s310 = sld [smem:[#allocation2 + $0x380]]
        %v311 = vstv %s310
        %v312 = vmul.f32 %v311, %v282
        %v313 = vadd.f32 %v309, %v312
        %vm314 = vcmp.gt.f32.partialorder %v313, 0.0
        %v315 = vmul.f32 %v313, 0.01
        %v316 = vsel %vm314, %v313, %v315
        %s317 = sld [smem:[#allocation2 + $0x1]]
        %v318 = vstv %s317
        %v319 = vmul.f32 %v318, %v268
        %s320 = sld [smem:[#allocation2 + $0x81]]
        %v321 = vstv %s320
        %v322 = vmul.f32 %v321, %v270
        %v323 = vadd.f32 %v319, %v322
        %s324 = sld [smem:[#allocation2 + $0x101]]
        %v325 = vstv %s324
        %v326 = vmul.f32 %v325, %v272
        %v327 = vadd.f32 %v323, %v326
        %s328 = sld [smem:[#allocation2 + $0x181]]
        %v329 = vstv %s328
        %v330 = vmul.f32 %v329, %v274
        %v331 = vadd.f32 %v327, %v330
        %s332 = sld [smem:[#allocation2 + $0x201]]
        %v333 = vstv %s332
        %v334 = vmul.f32 %v333, %v276
        %v335 = vadd.f32 %v331, %v334
        %s336 = sld [smem:[#allocation2 + $0x281]]
        %v337 = vstv %s336
        %v338 = vmul.f32 %v337, %v278
        %v339 = vadd.f32 %v335, %v338
        %s340 = sld [smem:[#allocation2 + $0x301]]
        %v341 = vstv %s340
        %v342 = vmul.f32 %v341, %v280
        %v343 = vadd.f32 %v339, %v342
        %s344 = sld [smem:[#allocation2 + $0x381]]
        %v345 = vstv %s344
        %v346 = vmul.f32 %v345, %v282
        %v347 = vadd.f32 %v343, %v346
        %vm348 = vcmp.gt.f32.partialorder %v347, 0.0
        %v349 = vmul.f32 %v347, 0.01
        %v350 = vsel %vm348, %v347, %v349
        %s351 = sld [smem:[#allocation2 + $0x2]]
        %v352 = vstv %s351
        %v353 = vmul.f32 %v352, %v268
        %s354 = sld [smem:[#allocation2 + $0x82]]
        %v355 = vstv %s354
        %v356 = vmul.f32 %v355, %v270
        %v357 = vadd.f32 %v353, %v356
        %s358 = sld [smem:[#allocation2 + $0x102]]
        %v359 = vstv %s358
        %v360 = vmul.f32 %v359, %v272
        %v361 = vadd.f32 %v357, %v360
        %s362 = sld [smem:[#allocation2 + $0x182]]
        %v363 = vstv %s362
        %v364 = vmul.f32 %v363, %v274
        %v365 = vadd.f32 %v361, %v364
        %s366 = sld [smem:[#allocation2 + $0x202]]
        %v367 = vstv %s366
        %v368 = vmul.f32 %v367, %v276
        %v369 = vadd.f32 %v365, %v368
        %s370 = sld [smem:[#allocation2 + $0x282]]
        %v371 = vstv %s370
        %v372 = vmul.f32 %v371, %v278
        %v373 = vadd.f32 %v369, %v372
        %s374 = sld [smem:[#allocation2 + $0x302]]
        %v375 = vstv %s374
        %v376 = vmul.f32 %v375, %v280
        %v377 = vadd.f32 %v373, %v376
        %s378 = sld [smem:[#allocation2 + $0x382]]
        %v379 = vstv %s378
        %v380 = vmul.f32 %v379, %v282
        %v381 = vadd.f32 %v377, %v380
        %vm382 = vcmp.gt.f32.partialorder %v381, 0.0
        %v383 = vmul.f32 %v381, 0.01
        %v384 = vsel %vm382, %v381, %v383
        %s385 = sld [smem:[#allocation2 + $0x3]]
        %v386 = vstv %s385
        %v387 = vmul.f32 %v386, %v268
        %s388 = sld [smem:[#allocation2 + $0x83]]
        %v389 = vstv %s388
        %v390 = vmul.f32 %v389, %v270
        %v391 = vadd.f32 %v387, %v390
        %s392 = sld [smem:[#allocation2 + $0x103]]
        %v393 = vstv %s392
        %v394 = vmul.f32 %v393, %v272
        %v395 = vadd.f32 %v391, %v394
        %s396 = sld [smem:[#allocation2 + $0x183]]
        %v397 = vstv %s396
        %v398 = vmul.f32 %v397, %v274
        %v399 = vadd.f32 %v395, %v398
        %s400 = sld [smem:[#allocation2 + $0x203]]
        %v401 = vstv %s400
        %v402 = vmul.f32 %v401, %v276
        %v403 = vadd.f32 %v399, %v402
        %s404 = sld [smem:[#allocation2 + $0x283]]
        %v405 = vstv %s404
        %v406 = vmul.f32 %v405, %v278
        %v407 = vadd.f32 %v403, %v406
        %s408 = sld [smem:[#allocation2 + $0x303]]
        %v409 = vstv %s408
        %v410 = vmul.f32 %v409, %v280
        %v411 = vadd.f32 %v407, %v410
        %s412 = sld [smem:[#allocation2 + $0x383]]
        %v413 = vstv %s412
        %v414 = vmul.f32 %v413, %v282
        %v415 = vadd.f32 %v411, %v414
        %vm416 = vcmp.gt.f32.partialorder %v415, 0.0
        %v417 = vmul.f32 %v415, 0.01
        %v418 = vsel %vm416, %v415, %v417
        %s419 = sld [smem:[#allocation4]]
        %v420 = vstv %s419
        %v421 = vmul.f32 %v420, %v316
        %s422 = sld [smem:[#allocation4 + $0x80]]
        %v423 = vstv %s422
        %v424 = vmul.f32 %v423, %v350
        %v425 = vadd.f32 %v421, %v424
        %s426 = sld [smem:[#allocation4 + $0x100]]
        %v427 = vstv %s426
        %v428 = vmul.f32 %v427, %v384
        %v429 = vadd.f32 %v425, %v428
        %s430 = sld [smem:[#allocation4 + $0x180]]
        %v431 = vstv %s430
        %v432 = vmul.f32 %v431, %v418
        %v433 = vadd.f32 %v429, %v432
        %vm434 = vcmp.gt.f32.partialorder %v433, 0.0
        %v435 = vmul.f32 %v433, 0.01
        %v436 = vsel %vm434, %v433, %v435
        %s437 = sld [smem:[#allocation4 + $0x1]]
        %v438 = vstv %s437
        %v439 = vmul.f32 %v438, %v316
        %s440 = sld [smem:[#allocation4 + $0x81]]
        %v441 = vstv %s440
        %v442 = vmul.f32 %v441, %v350
        %v443 = vadd.f32 %v439, %v442
        %s444 = sld [smem:[#allocation4 + $0x101]]
        %v445 = vstv %s444
        %v446 = vmul.f32 %v445, %v384
        %v447 = vadd.f32 %v443, %v446
        %s448 = sld [smem:[#allocation4 + $0x181]]
        %v449 = vstv %s448
        %v450 = vmul.f32 %v449, %v418
        %v451 = vadd.f32 %v447, %v450
        %vm452 = vcmp.gt.f32.partialorder %v451, 0.0
        %v453 = vmul.f32 %v451, 0.01
        %v454 = vsel %vm452, %v451, %v453
        %s455 = sld [smem:[#allocation6]]
        %v456 = vstv %s455
        %v457 = vmul.f32 %v456, %v436
        %s458 = sld [smem:[#allocation6 + $0x80]]
        %v459 = vstv %s458
        %v460 = vmul.f32 %v459, %v454
        %v461 = vadd.f32 %v457, %v460
        %v462 = vxor.u32 %v461, 2147483648
        %v463 = vmul.f32 %v462, 1.442695
        %v464 = vpow.pop %v463
        %v465 = vadd.f32 %v464, 1.0
        %v466 = vrcp.pop %v465
        %v467 = vmul.f32 1.0, %v466
        %v468 = vmul.f32 %v268, %v467
        %469 = vst [vmem:[%s267] sm:$0x3] %v468
        %v470 = vmul.f32 %v270, %v467
        %s471 = scalar_lea.vmem %s267, 2
        %472 = vst [vmem:[%s471] sm:$0x3] %v470
        %v473 = vmul.f32 %v272, %v467
        %s474 = scalar_lea.vmem %s267, 4
        %475 = vst [vmem:[%s474] sm:$0x3] %v473
        %v476 = vmul.f32 %v274, %v467
        %s477 = scalar_lea.vmem %s267, 6
        %478 = vst [vmem:[%s477] sm:$0x3] %v476
        %v479 = vmul.f32 %v276, %v467
        %s480 = scalar_lea.vmem %s267, 8
        %481 = vst [vmem:[%s480] sm:$0x3] %v479
        %v482 = vmul.f32 %v278, %v467
        %s483 = scalar_lea.vmem %s267, 10
        %484 = vst [vmem:[%s483] sm:$0x3] %v482
        %v485 = vmul.f32 %v280, %v467
        %s486 = scalar_lea.vmem %s267, 12
        %487 = vst [vmem:[%s486] sm:$0x3] %v485
        %v488 = vmul.f32 %v282, %v467
        %s489 = scalar_lea.vmem %s267, 14
        %490 = vst [vmem:[%s489] sm:$0x3] %v488
        %p491 = scmp.lt.s32.totalorder %s21, 1
        %s492 = scalar_select %p491, %s21, 1
        %p493 = scmp.lt.s32.totalorder %s22, 0
        %s494 = scalar_select %p493, %s22, 0
        %s495 = smul.addr %s492, 8
        %s496 = sadd.s32 %s494, %s495
        %s497 = smul.addr %s496, 2
        %s498 = scalar_lea.vmem %s4, %s497
        // Predicated region
        $region49: #{self_attention_pallas.1} parent=35 // pred_check
          %p499 = pneg %p140
        $region50: #{self_attention_pallas.1} parent=35 // pred_check_branch
          %501 = sbr.rel (%p499) target = $region52
        $region51: #{self_attention_pallas.1} parent=35 // pred_region
          _
        $region52: #{self_attention_pallas.1} parent=35 // pred_fallthru
          _
      $region36: #{self_attention_pallas.1} parent=5 // pred_fallthru
        _
      %p502 = scmp.le.s32.totalorder 2, %s12
      // Predicated region
      $region53: #{self_attention_pallas.1} parent=5 // pred_check
        %p503 = pneg %p502
      $region54: #{self_attention_pallas.1} parent=5 // pred_check_branch
        %505 = sbr.rel (%p503) target = $region56
      $region55: #{self_attention_pallas.1} parent=5 // pred_region
        %s506 = ssub.s32 %s12, 2
        // Predicated region
        $region57: #{self_attention_pallas.1} parent=55 // pred_check
          %p507 = pneg %p146
        $region58: #{self_attention_pallas.1} parent=55 // pred_check_branch
          %509 = sbr.rel (%p507) target = $region60
        $region59: #{self_attention_pallas.1} parent=55 // pred_region
          %p510 = scmp.lt.s32.totalorder %s23, 1
          %s511 = scalar_select %p510, %s23, 1
          %p512 = scmp.lt.s32.totalorder %s24, 0
          %s513 = scalar_select %p512, %s24, 0
          %s514 = smul.addr %s511, 8
          %s515 = sadd.s32 %s513, %s514
          %s516 = smul.addr %s515, 2
          %s517 = scalar_lea.vmem %s4, %s516
        $region60: #{self_attention_pallas.1} parent=55 // pred_fallthru
          _
      $region56: #{self_attention_pallas.1} parent=5 // pred_fallthru
        _
    $region6: #{self_attention_pallas.1} parent=1 // loop_footer
      %s16 = sadd.s32 1, %s12
    $region7: #{self_attention_pallas.1} parent=1 // loop_footer_branch
      %11 = sbr.rel target = $region3
    $region8: #{self_attention_pallas.1} parent=1 // loop_exit
      _
    %518 = vsyncpa [#allocation3], 1
    %s519 = scalar_lea.sflag [#allocation3], 1
    %520 = vsyncpa %s519, 1
    %521 = vsyncpa [#allocation5], 1

</llo_original>
